<compile_context>
chip_gen: v7x
topology: tpu7x:2x2x1
jax: 0.10.0
libtpu: 0.0.40
codegen_flags: <defaults>
</compile_context>

<pallas_src>
import functools

import jax
import jax.numpy as jnp
from jax import lax
from jax.experimental import pallas as pl
from jax.experimental.pallas import tpu as pltpu


# ----------------------------------------------------------------------------
# Pallas kernel: 3-D pixel shuffle (Shuffle(scale) on NCDHW input)
# ----------------------------------------------------------------------------
def _shuffle_kernel(x_ref, o_ref, *, s, D, H, W, c_blk):
    """One grid step shuffles a block of `c_blk` output channels.

    x_ref : (1, c_blk, s**3, D*H, W)       input block
    o_ref : (1, c_blk, D, s, H, s*s*W)     output block (pure view of NCDHW out)
    """
    sW = s * W
    # bf16 activations stay bf16 (MXU-native, exact for a one-hot matrix);
    # everything else computes in f32.
    cdtype = jnp.bfloat16 if x_ref.dtype == jnp.bfloat16 else jnp.float32

    # One-hot lane-interleave operands, generated in-kernel (no DMA'd constant)
    # and hoisted out of all loops:  psubs[sw][w, n] = 1  iff  n == w*s + sw.
    w_ids = lax.broadcasted_iota(jnp.int32, (W, sW), 0)
    n_ids = lax.broadcasted_iota(jnp.int32, (W, sW), 1)
    psubs = [(n_ids == w_ids * s + sw).astype(cdtype) for sw in range(s)]

    def per_channel(c):
        for sd in range(s):
            for sh in range(s):
                base = sd * s * s + sh * s
                # Accumulated per-channel MXU matmuls: K = W, N = s*W
                # (factor-s fewer MACs than a fused K = N = s^2*W matmul,
                # and no staging stores / scratch operand).
                y = jnp.dot(x_ref[0, c, base, :, :].astype(cdtype), psubs[0],
                            preferred_element_type=jnp.float32)
                for sw in range(1, s):
                    y = y + jnp.dot(
                        x_ref[0, c, base + sw, :, :].astype(cdtype), psubs[sw],
                        preferred_element_type=jnp.float32)
                # Rows of y are the (d, h) planes of the (sd, sh) output slab:
                # one bulk store into a contiguous lane range of width s*W
                # (128-aligned and unmasked whenever s*W % 128 == 0).
                o_ref[0, c, :, sd, :, sh * sW:(sh + 1) * sW] = (
                    y.astype(o_ref.dtype).reshape(D, H, sW))

    if c_blk == 1:
        per_channel(0)
    else:
        # Bounded live ranges / compile time for larger channel blocks.
        def body(c, carry):
            per_channel(c)
            return carry
        lax.fori_loop(0, c_blk, body, 0)


def _round_up(x, m):
    return (x + m - 1) // m * m


def _pick_c_blk(cout, per_c_bytes, budget_bytes, batch, target_steps=8):
    """Largest channel-block divisor that fits the VMEM budget while keeping
    >= target_steps total grid steps (>= ~4 per TensorCore on 2-TC parts)."""
    need_steps = min(target_steps, batch * cout)
    best = 1
    for d in range(1, cout + 1):
        if cout % d:
            continue
        if d * per_c_bytes <= budget_bytes and batch * (cout // d) >= need_steps:
            best = d
    return best


def shuffle3d(x, scale):
    """NCDHW 3-D pixel shuffle, equivalent to TriNet's Shuffle(scale)."""
    B, C, D, H, W = x.shape
    s = int(scale)
    assert C % (s ** 3) == 0, "channels must be divisible by scale**3"
    cout = C // s ** 3
    DH = D * H
    k = s * s * W                 # lane width of the output view's last dim
    dtype = x.dtype

    # Pure view (adjacent-dim splits/merges only).
    xg = x.reshape(B, cout, s ** 3, DH, W)

    # --- generation-aware VMEM accounting (lane/sublane padded, x2 dbl-buf) --
    itemsize = jnp.dtype(dtype).itemsize
    sub = 16 if itemsize == 2 else 8                       # sublane packing
    in_bytes_per_c = (s ** 3) * _round_up(DH, sub) * _round_up(W, 128) * itemsize
    out_bytes_per_c = (D * s) * _round_up(H, sub) * _round_up(k, 128) * itemsize
    per_c = 2 * (in_bytes_per_c + out_bytes_per_c)         # x2: double buffering
    try:
        vmem_cap = int(pltpu.get_tpu_info().vmem_capacity_bytes)
    except Exception:
        vmem_cap = 64 << 20                                # v7x per-TC (smallest)
    budget = min(24 << 20, vmem_cap // 2)                  # per-step block budget
    c_blk = _pick_c_blk(cout, per_c, budget, B, target_steps=8)
    step_bytes = c_blk * per_c
    vmem_limit = int(min(vmem_cap * 3 // 4, max(budget, step_bytes) + (8 << 20)))
    # TODO(synk): for very large D*H*W where a single output channel already
    # exceeds the budget, additionally tile D onto the grid.

    out6 = pl.pallas_call(
        functools.partial(_shuffle_kernel, s=s, D=D, H=H, W=W, c_blk=c_blk),
        out_shape=jax.ShapeDtypeStruct((B, cout, D, s, H, k), dtype),
        grid=(B, cout // c_blk),
        in_specs=[pl.BlockSpec((1, c_blk, s ** 3, DH, W),
                               lambda b, cb: (b, cb, 0, 0, 0))],
        out_specs=pl.BlockSpec((1, c_blk, D, s, H, k),
                               lambda b, cb: (b, cb, 0, 0, 0, 0)),
        compiler_params=pltpu.CompilerParams(
            dimension_semantics=("parallel", "parallel"),
            vmem_limit_bytes=vmem_limit),
    )(xg)

    # (B, cout, D, s, H, s*s*W) -> (B, cout, D*s, H*s, W*s): pure view.
    return out6.reshape(B, cout, D * s, H * s, W * s)


def shuffle3d_ref(x, scale):
    """Pure-JAX reference mirroring the PyTorch Shuffle module exactly."""
    B, C, D, H, W = x.shape
    s = scale
    cout = C // s ** 3
    xv = x.reshape(B, cout, s, s, s, D, H, W)
    out = jnp.transpose(xv, (0, 1, 5, 2, 6, 3, 7, 4))
    return out.reshape(B, cout, D * s, H * s, W * s)


# ----------------------------------------------------------------------------
# Remaining MRHU pieces (XLA ops).
# TODO(synk): dilated Conv3d / ConvTranspose3d / trilinear Upsample are left to
# XLA (lax.conv_general_dilated, jax.image.resize); only the Shuffle data
# movement is a hand-written Pallas kernel.
# ----------------------------------------------------------------------------
def leaky_relu(x, slope=0.1):
    # Left as jnp.where so XLA fuses it into the producing conv (perf review:
    # a standalone elementwise kernel adds a full HBM read+write pass).
    return jnp.where(x > 0, x, x * slope)


def conv3d(x, w, b, *, padding, dilation=1):
    out = lax.conv_general_dilated(
        x, w, window_strides=(1, 1, 1),
        padding=[(padding, padding)] * 3,
        rhs_dilation=(dilation,) * 3,
        dimension_numbers=("NCDHW", "OIDHW", "NCDHW"))
    return out + b[None, :, None, None, None]


def conv_transpose3d(x, w, b, *, stride=2, padding=1):
    # w uses the PyTorch ConvTranspose3d layout (in_ch, out_ch, kD, kH, kW).
    kern = w.shape[-1]
    w_t = jnp.transpose(jnp.flip(w, axis=(-3, -2, -1)), (1, 0, 2, 3, 4))
    pad = kern - 1 - padding
    out = lax.conv_general_dilated(
        x, w_t, window_strides=(1, 1, 1),
        padding=[(pad, pad)] * 3,
        lhs_dilation=(stride,) * 3,
        dimension_numbers=("NCDHW", "OIDHW", "NCDHW"))
    return out + b[None, :, None, None, None]


def upsample_trilinear_x2(x):
    B, C, D, H, W = x.shape
    # jax.image.resize (half-pixel centers) matches align_corners=False.
    return jax.image.resize(x, (B, C, 2 * D, 2 * H, 2 * W), method="trilinear")


def init_mrhu_params(key, in_c, skip_c=0):
    out_c = in_c * 2
    ks = jax.random.split(key, 6)

    def w(kk, o, i, kern):
        return 0.05 * jax.random.normal(kk, (o, i, kern, kern, kern), jnp.float32)

    return {
        "conv1_w": w(ks[0], out_c, in_c + skip_c, 3), "conv1_b": jnp.zeros((out_c,), jnp.float32),
        "conv2_w": w(ks[1], out_c, in_c + skip_c, 3), "conv2_b": jnp.zeros((out_c,), jnp.float32),
        "conv3_w": w(ks[2], out_c, in_c + skip_c, 3), "conv3_b": jnp.zeros((out_c,), jnp.float32),
        "conv4_w": w(ks[3], out_c, in_c + skip_c, 3), "conv4_b": jnp.zeros((out_c,), jnp.float32),
        "trans_w": 0.05 * jax.random.normal(ks[4], (2 * out_c, in_c // 2, 4, 4, 4), jnp.float32),
        "trans_b": jnp.zeros((in_c // 2,), jnp.float32),
        "fusion_w": w(ks[5], in_c, in_c, 3), "fusion_b": jnp.zeros((in_c,), jnp.float32),
    }


def mrhu_forward(params, x, up_scale, skip=None):
    h_up = upsample_trilinear_x2(x)
    if skip is not None:
        x = jnp.concatenate([x, skip], axis=1)
    x1 = leaky_relu(conv3d(x, params["conv1_w"], params["conv1_b"], padding=1, dilation=1))
    x2 = leaky_relu(conv3d(x, params["conv2_w"], params["conv2_b"], padding=2, dilation=2))
    x3 = leaky_relu(conv3d(x, params["conv3_w"], params["conv3_b"], padding=3, dilation=3))
    x4 = leaky_relu(conv3d(x, params["conv4_w"], params["conv4_b"], padding=4, dilation=4))
    x1_ = conv_transpose3d(jnp.concatenate([x1, x3], axis=1),
                           params["trans_w"], params["trans_b"], stride=2, padding=1)
    x2_ = shuffle3d(jnp.concatenate([x2, x4], axis=1), up_scale)   # Pallas kernel
    x = jnp.concatenate([x1_, x2_], axis=1)
    x = conv3d(x, params["fusion_w"], params["fusion_b"], padding=1)
    x = x + h_up
    # Same `fusion` weights applied twice, exactly as in the PyTorch module.
    x = conv3d(x, params["fusion_w"], params["fusion_b"], padding=1)
    return x


if __name__ == "__main__":
    key = jax.random.PRNGKey(0)
    k1, k2, k3, k_par, k_in = jax.random.split(key, 5)

    # 1) standalone correctness of the Pallas shuffle kernel (f32, c_blk == 1)
    xs = jax.random.normal(k1, (2, 16, 4, 4, 4), jnp.float32)
    y = jax.block_until_ready(shuffle3d(xs, 2))
    assert y.shape == (2, 2, 8, 8, 8)
    assert bool(jnp.allclose(y, shuffle3d_ref(xs, 2), atol=1e-6, rtol=1e-6)), \
        "Pallas shuffle (f32) mismatch"

    # 2) bf16 path: native bf16 x bf16 -> f32 one-hot matmul is bit-exact
    xb = jax.random.normal(k2, (1, 16, 8, 8, 8), jnp.float32).astype(jnp.bfloat16)
    yb = jax.block_until_ready(shuffle3d(xb, 2))
    assert yb.dtype == jnp.bfloat16
    assert bool(jnp.array_equal(yb, shuffle3d_ref(xb, 2))), "Pallas shuffle (bf16) mismatch"

    # 3) larger channel count: exercises c_blk > 1 -> lax.fori_loop channel loop
    xl = jax.random.normal(k3, (1, 128, 4, 4, 4), jnp.float32)
    yl = jax.block_until_ready(shuffle3d(xl, 2))
    assert bool(jnp.allclose(yl, shuffle3d_ref(xl, 2), atol=1e-6, rtol=1e-6)), \
        "Pallas shuffle (blocked channels) mismatch"

    # 4) full MRHU forward (in_c=4, up_scale=2, no skip) with the Pallas shuffle
    in_c, up_scale = 4, 2
    params = init_mrhu_params(k_par, in_c)
    x = jax.random.normal(k_in, (2, in_c, 4, 4, 4), jnp.float32)
    out = jax.block_until_ready(mrhu_forward(params, x, up_scale))
    assert out.shape == (2, in_c, 8, 8, 8)
    assert bool(jnp.all(jnp.isfinite(out)))

    print("KERNEL_OK")
</pallas_src>

<mosaic_0001>
module attributes {stable_mosaic.version = 11 : i64} {
  func.func @_shuffle_kernel(%arg0: i32, %arg1: i32, %arg2: memref<1x1x8x16x4xf32, #tpu.memory_space<vmem>>, %arg3: memref<1x1x4x2x4x16xf32, #tpu.memory_space<vmem>>) attributes {dimension_semantics = [#tpu.dimension_semantics<parallel>, #tpu.dimension_semantics<parallel>], iteration_bounds = array<i64: 2, 2>, scalar_prefetch = 0 : i64, scratch_operands = 0 : i64, tpu.core_type = #tpu.core_type<tc>, window_params = [{transform_indices = @transform_0, window_bounds = array<i64: 1, 1, 8, 16, 4>}, {transform_indices = @transform_1, window_bounds = array<i64: 1, 1, 4, 2, 4, 16>}]} {
    %0 = tpu.iota {dimensions = array<i32: 0>} : vector<4x8xi32>
    %1 = tpu.iota {dimensions = array<i32: 1>} : vector<4x8xi32>
    %c2_i32 = arith.constant 2 : i32
    %2 = vector.broadcast %c2_i32 : i32 to vector<4x8xi32>
    %3 = arith.muli %0, %2 : vector<4x8xi32>
    %c0_i32 = arith.constant 0 : i32
    %4 = vector.broadcast %c0_i32 : i32 to vector<4x8xi32>
    %5 = arith.addi %3, %4 : vector<4x8xi32>
    %6 = arith.cmpi eq, %1, %5 : vector<4x8xi32>
    %7 = arith.extui %6 : vector<4x8xi1> to vector<4x8xi32>
    %8 = arith.sitofp %7 : vector<4x8xi32> to vector<4x8xf32>
    %c2_i32_0 = arith.constant 2 : i32
    %9 = vector.broadcast %c2_i32_0 : i32 to vector<4x8xi32>
    %10 = arith.muli %0, %9 : vector<4x8xi32>
    %c1_i32 = arith.constant 1 : i32
    %11 = vector.broadcast %c1_i32 : i32 to vector<4x8xi32>
    %12 = arith.addi %10, %11 : vector<4x8xi32>
    %13 = arith.cmpi eq, %1, %12 : vector<4x8xi32>
    %14 = arith.extui %13 : vector<4x8xi1> to vector<4x8xi32>
    %15 = arith.sitofp %14 : vector<4x8xi32> to vector<4x8xf32>
    %c0 = arith.constant 0 : index
    %c0_1 = arith.constant 0 : index
    %c0_2 = arith.constant 0 : index
    %c0_3 = arith.constant 0 : index
    %c0_4 = arith.constant 0 : index
    %16 = vector.load %arg2[%c0, %c0_1, %c0_2, %c0_3, %c0_4] : memref<1x1x8x16x4xf32, #tpu.memory_space<vmem>>, vector<1x1x1x16x4xf32>
    %17 = vector.shape_cast %16 : vector<1x1x1x16x4xf32> to vector<16x4xf32>
    %cst = arith.constant dense<0.000000e+00> : vector<16x8xf32>
    %18 = tpu.matmul %17, %8, %cst {dimension_numbers = #tpu.dot_dimension_numbers<[1], [0], [0], [1], [0, 0, 1, 1], [], []>} : vector<16x4xf32>, vector<4x8xf32>, vector<16x8xf32> -> vector<16x8xf32>
    %c0_5 = arith.constant 0 : index
    %c0_6 = arith.constant 0 : index
    %c1 = arith.constant 1 : index
    %c0_7 = arith.constant 0 : index
    %c0_8 = arith.constant 0 : index
    %19 = vector.load %arg2[%c0_5, %c0_6, %c1, %c0_7, %c0_8] : memref<1x1x8x16x4xf32, #tpu.memory_space<vmem>>, vector<1x1x1x16x4xf32>
    %20 = vector.shape_cast %19 : vector<1x1x1x16x4xf32> to vector<16x4xf32>
    %cst_9 = arith.constant dense<0.000000e+00> : vector<16x8xf32>
    %21 = tpu.matmul %20, %15, %cst_9 {dimension_numbers = #tpu.dot_dimension_numbers<[1], [0], [0], [1], [0, 0, 1, 1], [], []>} : vector<16x4xf32>, vector<4x8xf32>, vector<16x8xf32> -> vector<16x8xf32>
    %22 = arith.addf %18, %21 : vector<16x8xf32>
    %23 = vector.shape_cast %22 : vector<16x8xf32> to vector<4x4x8xf32>
    %c0_10 = arith.constant 0 : index
    %c0_11 = arith.constant 0 : index
    %c0_12 = arith.constant 0 : index
    %c0_13 = arith.constant 0 : index
    %c0_14 = arith.constant 0 : index
    %c0_15 = arith.constant 0 : index
    %24 = vector.load %arg3[%c0_10, %c0_11, %c0_12, %c0_13, %c0_14, %c0_15] : memref<1x1x4x2x4x16xf32, #tpu.memory_space<vmem>>, vector<1x1x4x1x4x8xf32>
    %25 = vector.shape_cast %24 : vector<1x1x4x1x4x8xf32> to vector<4x4x8xf32>
    %26 = vector.shape_cast %23 : vector<4x4x8xf32> to vector<1x1x4x1x4x8xf32>
    tpu.vector_store %arg3[%c0_10, %c0_11, %c0_12, %c0_13, %c0_14, %c0_15], %26 {strides = array<i32>} : memref<1x1x4x2x4x16xf32, #tpu.memory_space<vmem>>, vector<1x1x4x1x4x8xf32>,
    %c0_16 = arith.constant 0 : index
    %c0_17 = arith.constant 0 : index
    %c2 = arith.constant 2 : index
    %c0_18 = arith.constant 0 : index
    %c0_19 = arith.constant 0 : index
    %27 = vector.load %arg2[%c0_16, %c0_17, %c2, %c0_18, %c0_19] : memref<1x1x8x16x4xf32, #tpu.memory_space<vmem>>, vector<1x1x1x16x4xf32>
    %28 = vector.shape_cast %27 : vector<1x1x1x16x4xf32> to vector<16x4xf32>
    %cst_20 = arith.constant dense<0.000000e+00> : vector<16x8xf32>
    %29 = tpu.matmul %28, %8, %cst_20 {dimension_numbers = #tpu.dot_dimension_numbers<[1], [0], [0], [1], [0, 0, 1, 1], [], []>} : vector<16x4xf32>, vector<4x8xf32>, vector<16x8xf32> -> vector<16x8xf32>
    %c0_21 = arith.constant 0 : index
    %c0_22 = arith.constant 0 : index
    %c3 = arith.constant 3 : index
    %c0_23 = arith.constant 0 : index
    %c0_24 = arith.constant 0 : index
    %30 = vector.load %arg2[%c0_21, %c0_22, %c3, %c0_23, %c0_24] : memref<1x1x8x16x4xf32, #tpu.memory_space<vmem>>, vector<1x1x1x16x4xf32>
    %31 = vector.shape_cast %30 : vector<1x1x1x16x4xf32> to vector<16x4xf32>
    %cst_25 = arith.constant dense<0.000000e+00> : vector<16x8xf32>
    %32 = tpu.matmul %31, %15, %cst_25 {dimension_numbers = #tpu.dot_dimension_numbers<[1], [0], [0], [1], [0, 0, 1, 1], [], []>} : vector<16x4xf32>, vector<4x8xf32>, vector<16x8xf32> -> vector<16x8xf32>
    %33 = arith.addf %29, %32 : vector<16x8xf32>
    %34 = vector.shape_cast %33 : vector<16x8xf32> to vector<4x4x8xf32>
    %c0_26 = arith.constant 0 : index
    %c0_27 = arith.constant 0 : index
    %c0_28 = arith.constant 0 : index
    %c0_29 = arith.constant 0 : index
    %c0_30 = arith.constant 0 : index
    %c8 = arith.constant 8 : index
    %35 = vector.load %arg3[%c0_26, %c0_27, %c0_28, %c0_29, %c0_30, %c8] : memref<1x1x4x2x4x16xf32, #tpu.memory_space<vmem>>, vector<1x1x4x1x4x8xf32>
    %36 = vector.shape_cast %35 : vector<1x1x4x1x4x8xf32> to vector<4x4x8xf32>
    %37 = vector.shape_cast %34 : vector<4x4x8xf32> to vector<1x1x4x1x4x8xf32>
    tpu.vector_store %arg3[%c0_26, %c0_27, %c0_28, %c0_29, %c0_30, %c8], %37 {strides = array<i32>} : memref<1x1x4x2x4x16xf32, #tpu.memory_space<vmem>>, vector<1x1x4x1x4x8xf32>,
    %c0_31 = arith.constant 0 : index
    %c0_32 = arith.constant 0 : index
    %c4 = arith.constant 4 : index
    %c0_33 = arith.constant 0 : index
    %c0_34 = arith.constant 0 : index
    %38 = vector.load %arg2[%c0_31, %c0_32, %c4, %c0_33, %c0_34] : memref<1x1x8x16x4xf32, #tpu.memory_space<vmem>>, vector<1x1x1x16x4xf32>
    %39 = vector.shape_cast %38 : vector<1x1x1x16x4xf32> to vector<16x4xf32>
    %cst_35 = arith.constant dense<0.000000e+00> : vector<16x8xf32>
    %40 = tpu.matmul %39, %8, %cst_35 {dimension_numbers = #tpu.dot_dimension_numbers<[1], [0], [0], [1], [0, 0, 1, 1], [], []>} : vector<16x4xf32>, vector<4x8xf32>, vector<16x8xf32> -> vector<16x8xf32>
    %c0_36 = arith.constant 0 : index
    %c0_37 = arith.constant 0 : index
    %c5 = arith.constant 5 : index
    %c0_38 = arith.constant 0 : index
    %c0_39 = arith.constant 0 : index
    %41 = vector.load %arg2[%c0_36, %c0_37, %c5, %c0_38, %c0_39] : memref<1x1x8x16x4xf32, #tpu.memory_space<vmem>>, vector<1x1x1x16x4xf32>
    %42 = vector.shape_cast %41 : vector<1x1x1x16x4xf32> to vector<16x4xf32>
    %cst_40 = arith.constant dense<0.000000e+00> : vector<16x8xf32>
    %43 = tpu.matmul %42, %15, %cst_40 {dimension_numbers = #tpu.dot_dimension_numbers<[1], [0], [0], [1], [0, 0, 1, 1], [], []>} : vector<16x4xf32>, vector<4x8xf32>, vector<16x8xf32> -> vector<16x8xf32>
    %44 = arith.addf %40, %43 : vector<16x8xf32>
    %45 = vector.shape_cast %44 : vector<16x8xf32> to vector<4x4x8xf32>
    %c0_41 = arith.constant 0 : index
    %c0_42 = arith.constant 0 : index
    %c0_43 = arith.constant 0 : index
    %c1_44 = arith.constant 1 : index
    %c0_45 = arith.constant 0 : index
    %c0_46 = arith.constant 0 : index
    %46 = vector.load %arg3[%c0_41, %c0_42, %c0_43, %c1_44, %c0_45, %c0_46] : memref<1x1x4x2x4x16xf32, #tpu.memory_space<vmem>>, vector<1x1x4x1x4x8xf32>
    %47 = vector.shape_cast %46 : vector<1x1x4x1x4x8xf32> to vector<4x4x8xf32>
    %48 = vector.shape_cast %45 : vector<4x4x8xf32> to vector<1x1x4x1x4x8xf32>
    tpu.vector_store %arg3[%c0_41, %c0_42, %c0_43, %c1_44, %c0_45, %c0_46], %48 {strides = array<i32>} : memref<1x1x4x2x4x16xf32, #tpu.memory_space<vmem>>, vector<1x1x4x1x4x8xf32>,
    %c0_47 = arith.constant 0 : index
    %c0_48 = arith.constant 0 : index
    %c6 = arith.constant 6 : index
    %c0_49 = arith.constant 0 : index
    %c0_50 = arith.constant 0 : index
    %49 = vector.load %arg2[%c0_47, %c0_48, %c6, %c0_49, %c0_50] : memref<1x1x8x16x4xf32, #tpu.memory_space<vmem>>, vector<1x1x1x16x4xf32>
    %50 = vector.shape_cast %49 : vector<1x1x1x16x4xf32> to vector<16x4xf32>
    %cst_51 = arith.constant dense<0.000000e+00> : vector<16x8xf32>
    %51 = tpu.matmul %50, %8, %cst_51 {dimension_numbers = #tpu.dot_dimension_numbers<[1], [0], [0], [1], [0, 0, 1, 1], [], []>} : vector<16x4xf32>, vector<4x8xf32>, vector<16x8xf32> -> vector<16x8xf32>
    %c0_52 = arith.constant 0 : index
    %c0_53 = arith.constant 0 : index
    %c7 = arith.constant 7 : index
    %c0_54 = arith.constant 0 : index
    %c0_55 = arith.constant 0 : index
    %52 = vector.load %arg2[%c0_52, %c0_53, %c7, %c0_54, %c0_55] : memref<1x1x8x16x4xf32, #tpu.memory_space<vmem>>, vector<1x1x1x16x4xf32>
    %53 = vector.shape_cast %52 : vector<1x1x1x16x4xf32> to vector<16x4xf32>
    %cst_56 = arith.constant dense<0.000000e+00> : vector<16x8xf32>
    %54 = tpu.matmul %53, %15, %cst_56 {dimension_numbers = #tpu.dot_dimension_numbers<[1], [0], [0], [1], [0, 0, 1, 1], [], []>} : vector<16x4xf32>, vector<4x8xf32>, vector<16x8xf32> -> vector<16x8xf32>
    %55 = arith.addf %51, %54 : vector<16x8xf32>
    %56 = vector.shape_cast %55 : vector<16x8xf32> to vector<4x4x8xf32>
    %c0_57 = arith.constant 0 : index
    %c0_58 = arith.constant 0 : index
    %c0_59 = arith.constant 0 : index
    %c1_60 = arith.constant 1 : index
    %c0_61 = arith.constant 0 : index
    %c8_62 = arith.constant 8 : index
    %57 = vector.load %arg3[%c0_57, %c0_58, %c0_59, %c1_60, %c0_61, %c8_62] : memref<1x1x4x2x4x16xf32, #tpu.memory_space<vmem>>, vector<1x1x4x1x4x8xf32>
    %58 = vector.shape_cast %57 : vector<1x1x4x1x4x8xf32> to vector<4x4x8xf32>
    %59 = vector.shape_cast %56 : vector<4x4x8xf32> to vector<1x1x4x1x4x8xf32>
    tpu.vector_store %arg3[%c0_57, %c0_58, %c0_59, %c1_60, %c0_61, %c8_62], %59 {strides = array<i32>} : memref<1x1x4x2x4x16xf32, #tpu.memory_space<vmem>>, vector<1x1x4x1x4x8xf32>,
    return
  }
  func.func @transform_0(%arg0: i32, %arg1: i32) -> (i32, i32, i32, i32, i32) {
    %c0_i32 = arith.constant 0 : i32
    %c0_i32_0 = arith.constant 0 : i32
    %c0_i32_1 = arith.constant 0 : i32
    %c0_i32_2 = arith.constant 0 : i32
    return %arg0, %arg1, %c0_i32, %c0_i32_0, %c0_i32_1 : i32, i32, i32, i32, i32
  }
  func.func @transform_1(%arg0: i32, %arg1: i32) -> (i32, i32, i32, i32, i32, i32) {
    %c0_i32 = arith.constant 0 : i32
    %c0_i32_0 = arith.constant 0 : i32
    %c0_i32_1 = arith.constant 0 : i32
    %c0_i32_2 = arith.constant 0 : i32
    %c0_i32_3 = arith.constant 0 : i32
    return %arg0, %arg1, %c0_i32, %c0_i32_0, %c0_i32_1, %c0_i32_2 : i32, i32, i32, i32, i32, i32
  }
}

</mosaic_0001>

<llo_original>
// kernel: tpu_custom_call.1
$region0: #{tpu_custom_call.1}
  #allocation0 [shape = 'u32[]', space=smem, size = 0x4, offset = 0x4, fixed_abs, tag = 'smem constant byte address 0x4 - core index']
  #allocation1 [shape = 'u32[144,128]{1,0:T(1,128)}', space=vmem, size = 0x12000, scoped, tag = 'internal scratch']
  %s0 = inlined_call_operand.vmem [shape: f32[2,2,8,16,4], index: 0, kind: input, shape index: {}]
  %s1 = inlined_call_operand.hbm [shape: f32[2,2,4,2,4,16], index: 1, kind: output, shape index: {}]
  %s2 = sld [smem:[#allocation0]]
  $region37: #{tpu_custom_call.1} parent=0
    _
  %s4 = ssub.s32 1, %s2
  %s5 = scalar_select 0, %s4, %s2
  $region1: #{tpu_custom_call.1} parent=0
    #allocation2 [shape = 'u8[32768]{0}', space=vmem, size = 0x8000, scoped, tag = 'output window, operand 0']
    #allocation3 [shape = 's32[2]{0}', space=sflag, size = 0x8, scoped, tag = 'scoped memory for tpu_custom_call.1']
    %6 = vsyncpa [#allocation3], 0
    %s7 = scalar_lea.sflag [#allocation3], 1
    %8 = vsyncpa %s7, 0
    loop: start=0, step=1, limit=6
    $region2: #{tpu_custom_call.1} parent=1 // loop_pre_header
      _
    $region3: #{tpu_custom_call.1} parent=1 // loop_header
      %s10 = sphi 0, %s14
      %p11 = scmp.ge.s32.totalorder %s10, 6
      %s17 = sphi 0, %s29
      %s18 = sphi 0, %s25
      %s19 = sphi 0, %s17
      %s20 = sphi 0, %s18
      %s21 = sphi 0, %s19
      %s22 = sphi 0, %s20
      %s34 = sphi 0, %s36
      %s37 = sphi 0, %s34
      %s38 = sphi 0, %s37
      %s54 = sphi 0, %s38
      %s62 = sphi 0, %s64
      %s65 = sphi 0, %s62
      %s66 = sphi 0, %s65
      %s82 = sphi 0, %s66
    $region4: #{tpu_custom_call.1} parent=1 // loop_header_branch
      %13 = sbr.rel (%p11) target = $region8
    $region5: #{tpu_custom_call.1} parent=1 // loop_body
      %s15 = ssub.s32 %s10, 1
      %s16 = ssub.s32 %s10, 2
      %s23 = sadd.s32 1, %s18
      %p24 = scmp.ge.s32.totalorder %s23, 2
      %s25 = scalar_select %p24, 0, %s23
      %s26 = sadd.s32 1, %s17
      %s27 = scalar_select %p24, %s26, %s17
      %p28 = scmp.ge.s32.totalorder %s27, 2
      %s29 = scalar_select %p28, 0, %s27
      %s30 = ssub.s32 %s17, %s29
      %s31 = ssub.s32 %s18, %s25
      %s32 = sor.u32 %s30, %s31
      %p33 = scmp.eq.s32.totalorder %s32, 0
      %s35 = sadd.s32 %s34, 1
      %s36 = scalar_select %p33, %s34, %s35
      %p39 = pneg %p33
      %p40 = scmp.eq.s32.totalorder %s10, 3
      %p41 = por %p39, %p40
      %p42 = scmp.ne.s32.totalorder %s34, %s37
      %p43 = scmp.eq.s32.totalorder %s10, 0
      %p44 = por %p42, %p43
      %p45 = scmp.ne.s32.totalorder %s34, %s37
      %p46 = scmp.eq.s32.totalorder %s15, 3
      %p47 = por %p45, %p46
      %p48 = scmp.ne.s32.totalorder %s37, %s38
      %p49 = scmp.eq.s32.totalorder %s15, 0
      %p50 = por %p48, %p49
      %p51 = scmp.ne.s32.totalorder %s37, %s38
      %p52 = scmp.eq.s32.totalorder %s16, 3
      %p53 = por %p51, %p52
      %p55 = scmp.ne.s32.totalorder %s38, %s54
      %p56 = scmp.eq.s32.totalorder %s16, 0
      %p57 = por %p55, %p56
      %s58 = ssub.s32 %s17, %s29
      %s59 = ssub.s32 %s18, %s25
      %s60 = sor.u32 %s58, %s59
      %p61 = scmp.eq.s32.totalorder %s60, 0
      %s63 = sadd.s32 %s62, 1
      %s64 = scalar_select %p61, %s62, %s63
      %p67 = pneg %p61
      %p68 = scmp.eq.s32.totalorder %s10, 3
      %p69 = por %p67, %p68
      %p70 = scmp.ne.s32.totalorder %s62, %s65
      %p71 = scmp.eq.s32.totalorder %s10, 0
      %p72 = por %p70, %p71
      %p73 = scmp.ne.s32.totalorder %s62, %s65
      %p74 = scmp.eq.s32.totalorder %s15, 3
      %p75 = por %p73, %p74
      %p76 = scmp.ne.s32.totalorder %s65, %s66
      %p77 = scmp.eq.s32.totalorder %s15, 0
      %p78 = por %p76, %p77
      %p79 = scmp.ne.s32.totalorder %s65, %s66
      %p80 = scmp.eq.s32.totalorder %s16, 3
      %p81 = por %p79, %p80
      %p83 = scmp.ne.s32.totalorder %s66, %s82
      %p84 = scmp.eq.s32.totalorder %s16, 0
      %p85 = por %p83, %p84
      %p86 = scmp.le.s32.totalorder 1, %s10
      %p87 = scmp.lt.s32.totalorder %s10, 5
      %p88 = pnand %p86, %p87
      %p89 = pneg %p88
      // Predicated region
      $region9: #{tpu_custom_call.1} parent=5 // pred_check
        _
      $region10: #{tpu_custom_call.1} parent=5 // pred_check_branch
        %91 = sbr.rel (%p88) target = $region12
      $region11: #{tpu_custom_call.1} parent=5 // pred_region
        %s92 = ssub.s32 %s10, 1
      $region12: #{tpu_custom_call.1} parent=5 // pred_fallthru
        _
      %p93 = scmp.lt.s32.totalorder %s10, 4
      // Predicated region
      $region13: #{tpu_custom_call.1} parent=5 // pred_check
        %p94 = pneg %p93
      $region14: #{tpu_custom_call.1} parent=5 // pred_check_branch
        %96 = sbr.rel (%p94) target = $region16
      $region15: #{tpu_custom_call.1} parent=5 // pred_region
        // Predicated region
        $region17: #{tpu_custom_call.1} parent=15 // pred_check
          %p97 = pneg %p44
        $region18: #{tpu_custom_call.1} parent=15 // pred_check_branch
          %99 = sbr.rel (%p97) target = $region20
        $region19: #{tpu_custom_call.1} parent=15 // pred_region
          %p100 = scmp.lt.s32.totalorder %s17, 1
          %s101 = scalar_select %p100, %s17, 1
          %p102 = scmp.lt.s32.totalorder %s18, 1
          %s103 = scalar_select %p102, %s18, 1
          %s104 = smul.addr %s103, 16
          %s105 = smul.addr %s101, 32
          %s106 = sadd.s32 %s104, %s105
          %s107 = smul.addr %s106, 8
          %s108 = scalar_lea.vmem %s0, %s107
        $region20: #{tpu_custom_call.1} parent=15 // pred_fallthru
          _
      $region16: #{tpu_custom_call.1} parent=5 // pred_fallthru
        _
      %p109 = scmp.le.s32.totalorder 1, %s10
      %p110 = scmp.lt.s32.totalorder %s10, 5
      %p111 = pnand %p109, %p110
      %p112 = pneg %p111
      // Predicated region
      $region21: #{tpu_custom_call.1} parent=5 // pred_check
        _
      $region22: #{tpu_custom_call.1} parent=5 // pred_check_branch
        %114 = sbr.rel (%p111) target = $region24
      $region23: #{tpu_custom_call.1} parent=5 // pred_region
        %s115 = ssub.s32 %s10, 1
        %p116 = scmp.lt.s32.totalorder %s19, 1
        %s117 = scalar_select %p116, %s19, 1
        %p118 = scmp.lt.s32.totalorder %s20, 1
        %s119 = scalar_select %p118, %s20, 1
        %s120 = smul.addr %s119, 16
        %s121 = smul.addr %s117, 32
        %s122 = sadd.s32 %s120, %s121
        %s123 = smul.addr %s122, 8
        %s124 = scalar_lea.vmem %s0, %s123
        %p125 = pneg %p50
        %p126 = pneg %p47
        %p127 = pneg %p78
        %p128 = pneg %p75
        %s129 = sand.u32 %s65, 1
        %s130 = scalar_lea.sflag [#allocation3], %s129
        %s131 = sand.u32 %s65, 1
        %s132 = smul.addr %s131, 32
        %s133 = scalar_lea.vmem [#allocation2], %s132
        %p134 = scmp.lt.s32.totalorder %s19, 1
        %s135 = scalar_select %p134, %s19, 1
        %p136 = scmp.lt.s32.totalorder %s20, 1
        %s137 = scalar_select %p136, %s20, 1
        %s138 = smul.addr %s137, 16
        %s139 = smul.addr %s135, 32
        %s140 = sadd.s32 %s138, %s139
        %s141 = smul.addr %s140, 8
        %s142 = scalar_lea.vmem %s0, %s141
        %v143 = vlaneseq
        %v144 = vshrl.u32 %v143, 7
        %v145 = vlaneseq
        %v146 = vand.u32 %v145, 127
        %v147 = vmul.u32 %v144, 2
        %vm148 = vcmp.eq.s32.totalorder %v146, %v147
        %v149 = vsel %vm148, 1, 0
        %v150 = vcvt.s32.f32 %v149
        %v151 = vadd.s32 %v147, 1
        %vm152 = vcmp.eq.s32.totalorder %v146, %v151
        %v153 = vsel %vm152, 1, 0
        %v154 = vcvt.s32.f32 %v153
        %v155 = vld [vmem:[%s142] sm:$0xff]
        %v156 = vld [vmem:[%s142 + $0x8] sm:$0xff]
        %s157 = scalar_lea.vmem %s142, 16
        %v158 = vld [vmem:[%s157] sm:$0xff]
        %v159 = vld [vmem:[%s157 + $0x8] sm:$0xff]
        %vm160 = vcmask 31744
        %v162 = vsel %vm160, %v158, 0
        %v165 = vsel %vm160, %v159, 0
        %vm167 = vcmask 1043456
        %v169 = vsel %vm167, %v154, 0
        %171 = vmatprep.subr.mxu0 0.0
        %172 = vmatpush1.msra.mxu0 %v169
        %173 = vmatprep.subr.mxu0 0.0
        %174 = vmatpush1.msra.mxu0 0.0
        %175 = vmatprep.subr.mxu0 0.0
        %176 = vmatpush1.msra.mxu0 0.0
        %177 = vmatprep.subr.mxu0 0.0
        %178 = vmatpush1.msra.mxu0 0.0
        %179 = vmatprep.subr.mxu0 0.0
        %180 = vmatpush1.msra.mxu0 0.0
        %181 = vmatprep.subr.mxu0 0.0
        %182 = vmatpush1.msra.mxu0 0.0
        %183 = vmatprep.subr.mxu0 0.0
        %184 = vmatpush1.msra.mxu0 0.0
        %185 = vmatprep.subr.mxu0 0.0
        %186 = vmatpush1.msra.mxu0 0.0
        %187 = vmatprep.subr.mxu0 0.0
        %188 = vmatpush1.msra.mxu0 0.0
        %189 = vmatprep.subr.mxu0 0.0
        %190 = vmatpush1.msra.mxu0 0.0
        %191 = vmatprep.subr.mxu0 0.0
        %192 = vmatpush1.msra.mxu0 0.0
        %193 = vmatprep.subr.mxu0 0.0
        %194 = vmatpush1.msra.mxu0 0.0
        %195 = vmatprep.subr.mxu0 0.0
        %196 = vmatpush1.msra.mxu0 0.0
        %197 = vmatprep.subr.mxu0 0.0
        %198 = vmatpush1.msra.mxu0 0.0
        %199 = vmatprep.subr.mxu0 0.0
        %200 = vmatpush1.msra.mxu0 0.0
        %201 = vmatprep.subr.mxu0 0.0
        %202 = vmatpush1.msra.mxu0 0.0
        %203 = vmatprep.subr.mxu0 0.0
        %204 = vmatpush1.msra.mxu0 0.0
        %205 = vmatprep.subr.mxu0 0.0
        %206 = vmatpush1.msra.mxu0 0.0
        %207 = vmatprep.subr.mxu0 0.0
        %208 = vmatpush1.msra.mxu0 0.0
        %209 = vmatprep.subr.mxu0 0.0
        %210 = vmatpush1.msra.mxu0 0.0
        %211 = vmatprep.subr.mxu0 0.0
        %212 = vmatpush1.msra.mxu0 0.0
        %213 = vmatprep.subr.mxu0 0.0
        %214 = vmatpush1.msra.mxu0 0.0
        %215 = vmatprep.subr.mxu0 0.0
        %216 = vmatpush1.msra.mxu0 0.0
        %217 = vmatprep.subr.mxu0 0.0
        %218 = vmatpush1.msra.mxu0 0.0
        %219 = vmatprep.subr.mxu0 0.0
        %220 = vmatpush1.msra.mxu0 0.0
        %221 = vmatprep.subr.mxu0 0.0
        %222 = vmatpush1.msra.mxu0 0.0
        %223 = vmatprep.subr.mxu0 0.0
        %224 = vmatpush1.msra.mxu0 0.0
        %225 = vmatprep.subr.mxu0 0.0
        %226 = vmatpush1.msra.mxu0 0.0
        %227 = vmatprep.subr.mxu0 0.0
        %228 = vmatpush1.msra.mxu0 0.0
        %229 = vmatprep.subr.mxu0 0.0
        %230 = vmatpush1.msra.mxu0 0.0
        %231 = vmatprep.subr.mxu0 0.0
        %232 = vmatpush1.msra.mxu0 0.0
        %233 = vmatprep.subr.mxu0 0.0
        %234 = vmatpush1.msra.mxu0 0.0
        %235 = vmatprep.mubr.f32.mxu0 0.0
        %236 = vmatmul.mubr.f32.gmra.mrb[0].mxu0 %v162
        %v237 = vpop.f32.mrb[0].mxu0
        %v238 = vadd.f32 0.0, %v237
        %v239 = vpop.f32.mrb[0].mxu0
        %240 = vmatprep.mubr.f32.mxu0 0.0
        %241 = vmatmul.mubr.f32.gmra.mrb[0].mxu0 %v165
        %v242 = vpop.f32.mrb[0].mxu0
        %v243 = vadd.f32 0.0, %v242
        %v244 = vpop.f32.mrb[0].mxu0
        %245 = vdwg.mxu0
        %v247 = vsel %vm160, %v155, 0
        %v250 = vsel %vm160, %v156, 0
        %v253 = vsel %vm167, %v150, 0
        %255 = vmatprep.subr.mxu0 0.0
        %256 = vmatpush1.msra.mxu0 %v253
        %257 = vmatprep.subr.mxu0 0.0
        %258 = vmatpush1.msra.mxu0 0.0
        %259 = vmatprep.subr.mxu0 0.0
        %260 = vmatpush1.msra.mxu0 0.0
        %261 = vmatprep.subr.mxu0 0.0
        %262 = vmatpush1.msra.mxu0 0.0
        %263 = vmatprep.subr.mxu0 0.0
        %264 = vmatpush1.msra.mxu0 0.0
        %265 = vmatprep.subr.mxu0 0.0
        %266 = vmatpush1.msra.mxu0 0.0
        %267 = vmatprep.subr.mxu0 0.0
        %268 = vmatpush1.msra.mxu0 0.0
        %269 = vmatprep.subr.mxu0 0.0
        %270 = vmatpush1.msra.mxu0 0.0
        %271 = vmatprep.subr.mxu0 0.0
        %272 = vmatpush1.msra.mxu0 0.0
        %273 = vmatprep.subr.mxu0 0.0
        %274 = vmatpush1.msra.mxu0 0.0
        %275 = vmatprep.subr.mxu0 0.0
        %276 = vmatpush1.msra.mxu0 0.0
        %277 = vmatprep.subr.mxu0 0.0
        %278 = vmatpush1.msra.mxu0 0.0
        %279 = vmatprep.subr.mxu0 0.0
        %280 = vmatpush1.msra.mxu0 0.0
        %281 = vmatprep.subr.mxu0 0.0
        %282 = vmatpush1.msra.mxu0 0.0
        %283 = vmatprep.subr.mxu0 0.0
        %284 = vmatpush1.msra.mxu0 0.0
        %285 = vmatprep.subr.mxu0 0.0
        %286 = vmatpush1.msra.mxu0 0.0
        %287 = vmatprep.subr.mxu0 0.0
        %288 = vmatpush1.msra.mxu0 0.0
        %289 = vmatprep.subr.mxu0 0.0
        %290 = vmatpush1.msra.mxu0 0.0
        %291 = vmatprep.subr.mxu0 0.0
        %292 = vmatpush1.msra.mxu0 0.0
        %293 = vmatprep.subr.mxu0 0.0
        %294 = vmatpush1.msra.mxu0 0.0
        %295 = vmatprep.subr.mxu0 0.0
        %296 = vmatpush1.msra.mxu0 0.0
        %297 = vmatprep.subr.mxu0 0.0
        %298 = vmatpush1.msra.mxu0 0.0
        %299 = vmatprep.subr.mxu0 0.0
        %300 = vmatpush1.msra.mxu0 0.0
        %301 = vmatprep.subr.mxu0 0.0
        %302 = vmatpush1.msra.mxu0 0.0
        %303 = vmatprep.subr.mxu0 0.0
        %304 = vmatpush1.msra.mxu0 0.0
        %305 = vmatprep.subr.mxu0 0.0
        %306 = vmatpush1.msra.mxu0 0.0
        %307 = vmatprep.subr.mxu0 0.0
        %308 = vmatpush1.msra.mxu0 0.0
        %309 = vmatprep.subr.mxu0 0.0
        %310 = vmatpush1.msra.mxu0 0.0
        %311 = vmatprep.subr.mxu0 0.0
        %312 = vmatpush1.msra.mxu0 0.0
        %313 = vmatprep.subr.mxu0 0.0
        %314 = vmatpush1.msra.mxu0 0.0
        %315 = vmatprep.subr.mxu0 0.0
        %316 = vmatpush1.msra.mxu0 0.0
        %317 = vmatprep.subr.mxu0 0.0
        %318 = vmatpush1.msra.mxu0 0.0
        %319 = vmatprep.mubr.f32.mxu0 0.0
        %320 = vmatmul.mubr.f32.gmra.mrb[0].mxu0 %v247
        %v321 = vpop.f32.mrb[0].mxu0
        %v322 = vadd.f32 %v238, %v321
        %v323 = vpop.f32.mrb[0].mxu0
        %324 = vmatprep.mubr.f32.mxu0 0.0
        %325 = vmatmul.mubr.f32.gmra.mrb[0].mxu0 %v250
        %v326 = vpop.f32.mrb[0].mxu0
        %v327 = vadd.f32 %v243, %v326
        %v328 = vpop.f32.mrb[0].mxu0
        %329 = vdwg.mxu0
        %v332 = vcombine.high %v322, %v322
        %v333 = vcombine.high %v327, %v327
        %vm336 = vcmask 60416
        %337 = vst.msk [vmem:[%s133] sm:$0xf] %vm336, %v322
        %338 = vst.msk [vmem:[%s133 + $0x8] sm:$0xf] %vm336, %v332
        %339 = vst.msk [vmem:[%s133 + $0x10] sm:$0xf] %vm336, %v327
        %340 = vst.msk [vmem:[%s133 + $0x18] sm:$0xf] %vm336, %v333
        %s341 = scalar_lea.vmem %s142, 32
        %v342 = vld [vmem:[%s341] sm:$0xff]
        %v343 = vld [vmem:[%s341 + $0x8] sm:$0xff]
        %s344 = scalar_lea.vmem %s142, 48
        %v345 = vld [vmem:[%s344] sm:$0xff]
        %v346 = vld [vmem:[%s344 + $0x8] sm:$0xff]
        %v348 = vsel %vm160, %v345, 0
        %v351 = vsel %vm160, %v346, 0
        %353 = vmatprep.subr.mxu0 0.0
        %354 = vmatpush1.msra.mxu0 %v169
        %355 = vmatprep.subr.mxu0 0.0
        %356 = vmatpush1.msra.mxu0 0.0
        %357 = vmatprep.subr.mxu0 0.0
        %358 = vmatpush1.msra.mxu0 0.0
        %359 = vmatprep.subr.mxu0 0.0
        %360 = vmatpush1.msra.mxu0 0.0
        %361 = vmatprep.subr.mxu0 0.0
        %362 = vmatpush1.msra.mxu0 0.0
        %363 = vmatprep.subr.mxu0 0.0
        %364 = vmatpush1.msra.mxu0 0.0
        %365 = vmatprep.subr.mxu0 0.0
        %366 = vmatpush1.msra.mxu0 0.0
        %367 = vmatprep.subr.mxu0 0.0
        %368 = vmatpush1.msra.mxu0 0.0
        %369 = vmatprep.subr.mxu0 0.0
        %370 = vmatpush1.msra.mxu0 0.0
        %371 = vmatprep.subr.mxu0 0.0
        %372 = vmatpush1.msra.mxu0 0.0
        %373 = vmatprep.subr.mxu0 0.0
        %374 = vmatpush1.msra.mxu0 0.0
        %375 = vmatprep.subr.mxu0 0.0
        %376 = vmatpush1.msra.mxu0 0.0
        %377 = vmatprep.subr.mxu0 0.0
        %378 = vmatpush1.msra.mxu0 0.0
        %379 = vmatprep.subr.mxu0 0.0
        %380 = vmatpush1.msra.mxu0 0.0
        %381 = vmatprep.subr.mxu0 0.0
        %382 = vmatpush1.msra.mxu0 0.0
        %383 = vmatprep.subr.mxu0 0.0
        %384 = vmatpush1.msra.mxu0 0.0
        %385 = vmatprep.subr.mxu0 0.0
        %386 = vmatpush1.msra.mxu0 0.0
        %387 = vmatprep.subr.mxu0 0.0
        %388 = vmatpush1.msra.mxu0 0.0
        %389 = vmatprep.subr.mxu0 0.0
        %390 = vmatpush1.msra.mxu0 0.0
        %391 = vmatprep.subr.mxu0 0.0
        %392 = vmatpush1.msra.mxu0 0.0
        %393 = vmatprep.subr.mxu0 0.0
        %394 = vmatpush1.msra.mxu0 0.0
        %395 = vmatprep.subr.mxu0 0.0
        %396 = vmatpush1.msra.mxu0 0.0
        %397 = vmatprep.subr.mxu0 0.0
        %398 = vmatpush1.msra.mxu0 0.0
        %399 = vmatprep.subr.mxu0 0.0
        %400 = vmatpush1.msra.mxu0 0.0
        %401 = vmatprep.subr.mxu0 0.0
        %402 = vmatpush1.msra.mxu0 0.0
        %403 = vmatprep.subr.mxu0 0.0
        %404 = vmatpush1.msra.mxu0 0.0
        %405 = vmatprep.subr.mxu0 0.0
        %406 = vmatpush1.msra.mxu0 0.0
        %407 = vmatprep.subr.mxu0 0.0
        %408 = vmatpush1.msra.mxu0 0.0
        %409 = vmatprep.subr.mxu0 0.0
        %410 = vmatpush1.msra.mxu0 0.0
        %411 = vmatprep.subr.mxu0 0.0
        %412 = vmatpush1.msra.mxu0 0.0
        %413 = vmatprep.subr.mxu0 0.0
        %414 = vmatpush1.msra.mxu0 0.0
        %415 = vmatprep.subr.mxu0 0.0
        %416 = vmatpush1.msra.mxu0 0.0
        %417 = vmatprep.mubr.f32.mxu0 0.0
        %418 = vmatmul.mubr.f32.gmra.mrb[0].mxu0 %v348
        %v419 = vpop.f32.mrb[0].mxu0
        %v420 = vadd.f32 0.0, %v419
        %v421 = vpop.f32.mrb[0].mxu0
        %422 = vmatprep.mubr.f32.mxu0 0.0
        %423 = vmatmul.mubr.f32.gmra.mrb[0].mxu0 %v351
        %v424 = vpop.f32.mrb[0].mxu0
        %v425 = vadd.f32 0.0, %v424
        %v426 = vpop.f32.mrb[0].mxu0
        %427 = vdwg.mxu0
        %v429 = vsel %vm160, %v342, 0
        %v432 = vsel %vm160, %v343, 0
        %434 = vmatprep.subr.mxu0 0.0
        %435 = vmatpush1.msra.mxu0 %v253
        %436 = vmatprep.subr.mxu0 0.0
        %437 = vmatpush1.msra.mxu0 0.0
        %438 = vmatprep.subr.mxu0 0.0
        %439 = vmatpush1.msra.mxu0 0.0
        %440 = vmatprep.subr.mxu0 0.0
        %441 = vmatpush1.msra.mxu0 0.0
        %442 = vmatprep.subr.mxu0 0.0
        %443 = vmatpush1.msra.mxu0 0.0
        %444 = vmatprep.subr.mxu0 0.0
        %445 = vmatpush1.msra.mxu0 0.0
        %446 = vmatprep.subr.mxu0 0.0
        %447 = vmatpush1.msra.mxu0 0.0
        %448 = vmatprep.subr.mxu0 0.0
        %449 = vmatpush1.msra.mxu0 0.0
        %450 = vmatprep.subr.mxu0 0.0
        %451 = vmatpush1.msra.mxu0 0.0
        %452 = vmatprep.subr.mxu0 0.0
        %453 = vmatpush1.msra.mxu0 0.0
        %454 = vmatprep.subr.mxu0 0.0
        %455 = vmatpush1.msra.mxu0 0.0
        %456 = vmatprep.subr.mxu0 0.0
        %457 = vmatpush1.msra.mxu0 0.0
        %458 = vmatprep.subr.mxu0 0.0
        %459 = vmatpush1.msra.mxu0 0.0
        %460 = vmatprep.subr.mxu0 0.0
        %461 = vmatpush1.msra.mxu0 0.0
        %462 = vmatprep.subr.mxu0 0.0
        %463 = vmatpush1.msra.mxu0 0.0
        %464 = vmatprep.subr.mxu0 0.0
        %465 = vmatpush1.msra.mxu0 0.0
        %466 = vmatprep.subr.mxu0 0.0
        %467 = vmatpush1.msra.mxu0 0.0
        %468 = vmatprep.subr.mxu0 0.0
        %469 = vmatpush1.msra.mxu0 0.0
        %470 = vmatprep.subr.mxu0 0.0
        %471 = vmatpush1.msra.mxu0 0.0
        %472 = vmatprep.subr.mxu0 0.0
        %473 = vmatpush1.msra.mxu0 0.0
        %474 = vmatprep.subr.mxu0 0.0
        %475 = vmatpush1.msra.mxu0 0.0
        %476 = vmatprep.subr.mxu0 0.0
        %477 = vmatpush1.msra.mxu0 0.0
        %478 = vmatprep.subr.mxu0 0.0
        %479 = vmatpush1.msra.mxu0 0.0
        %480 = vmatprep.subr.mxu0 0.0
        %481 = vmatpush1.msra.mxu0 0.0
        %482 = vmatprep.subr.mxu0 0.0
        %483 = vmatpush1.msra.mxu0 0.0
        %484 = vmatprep.subr.mxu0 0.0
        %485 = vmatpush1.msra.mxu0 0.0
        %486 = vmatprep.subr.mxu0 0.0
        %487 = vmatpush1.msra.mxu0 0.0
        %488 = vmatprep.subr.mxu0 0.0
        %489 = vmatpush1.msra.mxu0 0.0
        %490 = vmatprep.subr.mxu0 0.0
        %491 = vmatpush1.msra.mxu0 0.0
        %492 = vmatprep.subr.mxu0 0.0
        %493 = vmatpush1.msra.mxu0 0.0
        %494 = vmatprep.subr.mxu0 0.0
        %495 = vmatpush1.msra.mxu0 0.0
        %496 = vmatprep.subr.mxu0 0.0
        %497 = vmatpush1.msra.mxu0 0.0
        %498 = vmatprep.mubr.f32.mxu0 0.0
        %499 = vmatmul.mubr.f32.gmra.mrb[0].mxu0 %v429
        %v500 = vpop.f32.mrb[0].mxu0
        %v501 = vadd.f32 %v420, %v500
        %v502 = vpop.f32.mrb[0].mxu0
        %503 = vmatprep.mubr.f32.mxu0 0.0
        %504 = vmatmul.mubr.f32.gmra.mrb[0].mxu0 %v432
        %v505 = vpop.f32.mrb[0].mxu0
        %v506 = vadd.f32 %v425, %v505
        %v507 = vpop.f32.mrb[0].mxu0
        %508 = vdwg.mxu0
        %v511 = vcombine.high %v501, %v501
        %v512 = vcombine.high %v506, %v506
        %513 = vrot.lane.b32.xlu0 %v501, 8
        %v514 = vpop.permute.xlu0 %513
        %515 = vrot.lane.b32.xlu0 %v511, 8
        %v516 = vpop.permute.xlu0 %515
        %517 = vrot.lane.b32.xlu0 %v506, 8
        %v518 = vpop.permute.xlu0 %517
        %519 = vrot.lane.b32.xlu0 %v512, 8
        %v520 = vpop.permute.xlu0 %519
        %vm525 = vcmask 126016
        %526 = vst.msk [vmem:[%s133] sm:$0xf] %vm525, %v514
        %527 = vst.msk [vmem:[%s133 + $0x8] sm:$0xf] %vm525, %v516
        %528 = vst.msk [vmem:[%s133 + $0x10] sm:$0xf] %vm525, %v518
        %529 = vst.msk [vmem:[%s133 + $0x18] sm:$0xf] %vm525, %v520
        %s530 = scalar_lea.vmem %s142, 64
        %v531 = vld [vmem:[%s530] sm:$0xff]
        %v532 = vld [vmem:[%s530 + $0x8] sm:$0xff]
        %s533 = scalar_lea.vmem %s142, 80
        %v534 = vld [vmem:[%s533] sm:$0xff]
        %v535 = vld [vmem:[%s533 + $0x8] sm:$0xff]
        %v537 = vsel %vm160, %v534, 0
        %v540 = vsel %vm160, %v535, 0
        %542 = vmatprep.subr.mxu0 0.0
        %543 = vmatpush1.msra.mxu0 %v169
        %544 = vmatprep.subr.mxu0 0.0
        %545 = vmatpush1.msra.mxu0 0.0
        %546 = vmatprep.subr.mxu0 0.0
        %547 = vmatpush1.msra.mxu0 0.0
        %548 = vmatprep.subr.mxu0 0.0
        %549 = vmatpush1.msra.mxu0 0.0
        %550 = vmatprep.subr.mxu0 0.0
        %551 = vmatpush1.msra.mxu0 0.0
        %552 = vmatprep.subr.mxu0 0.0
        %553 = vmatpush1.msra.mxu0 0.0
        %554 = vmatprep.subr.mxu0 0.0
        %555 = vmatpush1.msra.mxu0 0.0
        %556 = vmatprep.subr.mxu0 0.0
        %557 = vmatpush1.msra.mxu0 0.0
        %558 = vmatprep.subr.mxu0 0.0
        %559 = vmatpush1.msra.mxu0 0.0
        %560 = vmatprep.subr.mxu0 0.0
        %561 = vmatpush1.msra.mxu0 0.0
        %562 = vmatprep.subr.mxu0 0.0
        %563 = vmatpush1.msra.mxu0 0.0
        %564 = vmatprep.subr.mxu0 0.0
        %565 = vmatpush1.msra.mxu0 0.0
        %566 = vmatprep.subr.mxu0 0.0
        %567 = vmatpush1.msra.mxu0 0.0
        %568 = vmatprep.subr.mxu0 0.0
        %569 = vmatpush1.msra.mxu0 0.0
        %570 = vmatprep.subr.mxu0 0.0
        %571 = vmatpush1.msra.mxu0 0.0
        %572 = vmatprep.subr.mxu0 0.0
        %573 = vmatpush1.msra.mxu0 0.0
        %574 = vmatprep.subr.mxu0 0.0
        %575 = vmatpush1.msra.mxu0 0.0
        %576 = vmatprep.subr.mxu0 0.0
        %577 = vmatpush1.msra.mxu0 0.0
        %578 = vmatprep.subr.mxu0 0.0
        %579 = vmatpush1.msra.mxu0 0.0
        %580 = vmatprep.subr.mxu0 0.0
        %581 = vmatpush1.msra.mxu0 0.0
        %582 = vmatprep.subr.mxu0 0.0
        %583 = vmatpush1.msra.mxu0 0.0
        %584 = vmatprep.subr.mxu0 0.0
        %585 = vmatpush1.msra.mxu0 0.0
        %586 = vmatprep.subr.mxu0 0.0
        %587 = vmatpush1.msra.mxu0 0.0
        %588 = vmatprep.subr.mxu0 0.0
        %589 = vmatpush1.msra.mxu0 0.0
        %590 = vmatprep.subr.mxu0 0.0
        %591 = vmatpush1.msra.mxu0 0.0
        %592 = vmatprep.subr.mxu0 0.0
        %593 = vmatpush1.msra.mxu0 0.0
        %594 = vmatprep.subr.mxu0 0.0
        %595 = vmatpush1.msra.mxu0 0.0
        %596 = vmatprep.subr.mxu0 0.0
        %597 = vmatpush1.msra.mxu0 0.0
        %598 = vmatprep.subr.mxu0 0.0
        %599 = vmatpush1.msra.mxu0 0.0
        %600 = vmatprep.subr.mxu0 0.0
        %601 = vmatpush1.msra.mxu0 0.0
        %602 = vmatprep.subr.mxu0 0.0
        %603 = vmatpush1.msra.mxu0 0.0
        %604 = vmatprep.subr.mxu0 0.0
        %605 = vmatpush1.msra.mxu0 0.0
        %606 = vmatprep.mubr.f32.mxu0 0.0
        %607 = vmatmul.mubr.f32.gmra.mrb[0].mxu0 %v537
        %v608 = vpop.f32.mrb[0].mxu0
        %v609 = vadd.f32 0.0, %v608
        %v610 = vpop.f32.mrb[0].mxu0
        %611 = vmatprep.mubr.f32.mxu0 0.0
        %612 = vmatmul.mubr.f32.gmra.mrb[0].mxu0 %v540
        %v613 = vpop.f32.mrb[0].mxu0
        %v614 = vadd.f32 0.0, %v613
        %v615 = vpop.f32.mrb[0].mxu0
        %616 = vdwg.mxu0
        %v618 = vsel %vm160, %v531, 0
        %v621 = vsel %vm160, %v532, 0
        %623 = vmatprep.subr.mxu0 0.0
        %624 = vmatpush1.msra.mxu0 %v253
        %625 = vmatprep.subr.mxu0 0.0
        %626 = vmatpush1.msra.mxu0 0.0
        %627 = vmatprep.subr.mxu0 0.0
        %628 = vmatpush1.msra.mxu0 0.0
        %629 = vmatprep.subr.mxu0 0.0
        %630 = vmatpush1.msra.mxu0 0.0
        %631 = vmatprep.subr.mxu0 0.0
        %632 = vmatpush1.msra.mxu0 0.0
        %633 = vmatprep.subr.mxu0 0.0
        %634 = vmatpush1.msra.mxu0 0.0
        %635 = vmatprep.subr.mxu0 0.0
        %636 = vmatpush1.msra.mxu0 0.0
        %637 = vmatprep.subr.mxu0 0.0
        %638 = vmatpush1.msra.mxu0 0.0
        %639 = vmatprep.subr.mxu0 0.0
        %640 = vmatpush1.msra.mxu0 0.0
        %641 = vmatprep.subr.mxu0 0.0
        %642 = vmatpush1.msra.mxu0 0.0
        %643 = vmatprep.subr.mxu0 0.0
        %644 = vmatpush1.msra.mxu0 0.0
        %645 = vmatprep.subr.mxu0 0.0
        %646 = vmatpush1.msra.mxu0 0.0
        %647 = vmatprep.subr.mxu0 0.0
        %648 = vmatpush1.msra.mxu0 0.0
        %649 = vmatprep.subr.mxu0 0.0
        %650 = vmatpush1.msra.mxu0 0.0
        %651 = vmatprep.subr.mxu0 0.0
        %652 = vmatpush1.msra.mxu0 0.0
        %653 = vmatprep.subr.mxu0 0.0
        %654 = vmatpush1.msra.mxu0 0.0
        %655 = vmatprep.subr.mxu0 0.0
        %656 = vmatpush1.msra.mxu0 0.0
        %657 = vmatprep.subr.mxu0 0.0
        %658 = vmatpush1.msra.mxu0 0.0
        %659 = vmatprep.subr.mxu0 0.0
        %660 = vmatpush1.msra.mxu0 0.0
        %661 = vmatprep.subr.mxu0 0.0
        %662 = vmatpush1.msra.mxu0 0.0
        %663 = vmatprep.subr.mxu0 0.0
        %664 = vmatpush1.msra.mxu0 0.0
        %665 = vmatprep.subr.mxu0 0.0
        %666 = vmatpush1.msra.mxu0 0.0
        %667 = vmatprep.subr.mxu0 0.0
        %668 = vmatpush1.msra.mxu0 0.0
        %669 = vmatprep.subr.mxu0 0.0
        %670 = vmatpush1.msra.mxu0 0.0
        %671 = vmatprep.subr.mxu0 0.0
        %672 = vmatpush1.msra.mxu0 0.0
        %673 = vmatprep.subr.mxu0 0.0
        %674 = vmatpush1.msra.mxu0 0.0
        %675 = vmatprep.subr.mxu0 0.0
        %676 = vmatpush1.msra.mxu0 0.0
        %677 = vmatprep.subr.mxu0 0.0
        %678 = vmatpush1.msra.mxu0 0.0
        %679 = vmatprep.subr.mxu0 0.0
        %680 = vmatpush1.msra.mxu0 0.0
        %681 = vmatprep.subr.mxu0 0.0
        %682 = vmatpush1.msra.mxu0 0.0
        %683 = vmatprep.subr.mxu0 0.0
        %684 = vmatpush1.msra.mxu0 0.0
        %685 = vmatprep.subr.mxu0 0.0
        %686 = vmatpush1.msra.mxu0 0.0
        %687 = vmatprep.mubr.f32.mxu0 0.0
        %688 = vmatmul.mubr.f32.gmra.mrb[0].mxu0 %v618
        %v689 = vpop.f32.mrb[0].mxu0
        %v690 = vadd.f32 %v609, %v689
        %v691 = vpop.f32.mrb[0].mxu0
        %692 = vmatprep.mubr.f32.mxu0 0.0
        %693 = vmatmul.mubr.f32.gmra.mrb[0].mxu0 %v621
        %v694 = vpop.f32.mrb[0].mxu0
        %v695 = vadd.f32 %v614, %v694
        %v696 = vpop.f32.mrb[0].mxu0
        %697 = vdwg.mxu0
        %v700 = vcombine.high %v690, %v690
        %v701 = vcombine.high %v695, %v695
        %s704 = scalar_lea.vmem %s133, 4 [#allocation2]
        %705 = vst.msk [vmem:[%s704] sm:$0xf] %vm336, %v690
        %706 = vst.msk [vmem:[%s704 + $0x8] sm:$0xf] %vm336, %v700
        %707 = vst.msk [vmem:[%s704 + $0x10] sm:$0xf] %vm336, %v695
        %708 = vst.msk [vmem:[%s704 + $0x18] sm:$0xf] %vm336, %v701
        %s709 = scalar_lea.vmem %s142, 96
        %v710 = vld [vmem:[%s709] sm:$0xff]
        %v711 = vld [vmem:[%s709 + $0x8] sm:$0xff]
        %s712 = scalar_lea.vmem %s142, 112
        %v713 = vld [vmem:[%s712] sm:$0xff]
        %v714 = vld [vmem:[%s712 + $0x8] sm:$0xff]
        %v716 = vsel %vm160, %v713, 0
        %v719 = vsel %vm160, %v714, 0
        %721 = vmatprep.subr.mxu0 0.0
        %722 = vmatpush1.msra.mxu0 %v169
        %723 = vmatprep.subr.mxu0 0.0
        %724 = vmatpush1.msra.mxu0 0.0
        %725 = vmatprep.subr.mxu0 0.0
        %726 = vmatpush1.msra.mxu0 0.0
        %727 = vmatprep.subr.mxu0 0.0
        %728 = vmatpush1.msra.mxu0 0.0
        %729 = vmatprep.subr.mxu0 0.0
        %730 = vmatpush1.msra.mxu0 0.0
        %731 = vmatprep.subr.mxu0 0.0
        %732 = vmatpush1.msra.mxu0 0.0
        %733 = vmatprep.subr.mxu0 0.0
        %734 = vmatpush1.msra.mxu0 0.0
        %735 = vmatprep.subr.mxu0 0.0
        %736 = vmatpush1.msra.mxu0 0.0
        %737 = vmatprep.subr.mxu0 0.0
        %738 = vmatpush1.msra.mxu0 0.0
        %739 = vmatprep.subr.mxu0 0.0
        %740 = vmatpush1.msra.mxu0 0.0
        %741 = vmatprep.subr.mxu0 0.0
        %742 = vmatpush1.msra.mxu0 0.0
        %743 = vmatprep.subr.mxu0 0.0
        %744 = vmatpush1.msra.mxu0 0.0
        %745 = vmatprep.subr.mxu0 0.0
        %746 = vmatpush1.msra.mxu0 0.0
        %747 = vmatprep.subr.mxu0 0.0
        %748 = vmatpush1.msra.mxu0 0.0
        %749 = vmatprep.subr.mxu0 0.0
        %750 = vmatpush1.msra.mxu0 0.0
        %751 = vmatprep.subr.mxu0 0.0
        %752 = vmatpush1.msra.mxu0 0.0
        %753 = vmatprep.subr.mxu0 0.0
        %754 = vmatpush1.msra.mxu0 0.0
        %755 = vmatprep.subr.mxu0 0.0
        %756 = vmatpush1.msra.mxu0 0.0
        %757 = vmatprep.subr.mxu0 0.0
        %758 = vmatpush1.msra.mxu0 0.0
        %759 = vmatprep.subr.mxu0 0.0
        %760 = vmatpush1.msra.mxu0 0.0
        %761 = vmatprep.subr.mxu0 0.0
        %762 = vmatpush1.msra.mxu0 0.0
        %763 = vmatprep.subr.mxu0 0.0
        %764 = vmatpush1.msra.mxu0 0.0
        %765 = vmatprep.subr.mxu0 0.0
        %766 = vmatpush1.msra.mxu0 0.0
        %767 = vmatprep.subr.mxu0 0.0
        %768 = vmatpush1.msra.mxu0 0.0
        %769 = vmatprep.subr.mxu0 0.0
        %770 = vmatpush1.msra.mxu0 0.0
        %771 = vmatprep.subr.mxu0 0.0
        %772 = vmatpush1.msra.mxu0 0.0
        %773 = vmatprep.subr.mxu0 0.0
        %774 = vmatpush1.msra.mxu0 0.0
        %775 = vmatprep.subr.mxu0 0.0
        %776 = vmatpush1.msra.mxu0 0.0
        %777 = vmatprep.subr.mxu0 0.0
        %778 = vmatpush1.msra.mxu0 0.0
        %779 = vmatprep.subr.mxu0 0.0
        %780 = vmatpush1.msra.mxu0 0.0
        %781 = vmatprep.subr.mxu0 0.0
        %782 = vmatpush1.msra.mxu0 0.0
        %783 = vmatprep.subr.mxu0 0.0
        %784 = vmatpush1.msra.mxu0 0.0
        %785 = vmatprep.mubr.f32.mxu0 0.0
        %786 = vmatmul.mubr.f32.gmra.mrb[0].mxu0 %v716
        %v787 = vpop.f32.mrb[0].mxu0
        %v788 = vadd.f32 0.0, %v787
        %v789 = vpop.f32.mrb[0].mxu0
        %790 = vmatprep.mubr.f32.mxu0 0.0
        %791 = vmatmul.mubr.f32.gmra.mrb[0].mxu0 %v719
        %v792 = vpop.f32.mrb[0].mxu0
        %v793 = vadd.f32 0.0, %v792
        %v794 = vpop.f32.mrb[0].mxu0
        %795 = vdwg.mxu0
        %v797 = vsel %vm160, %v710, 0
        %v800 = vsel %vm160, %v711, 0
        %802 = vmatprep.subr.mxu0 0.0
        %803 = vmatpush1.msra.mxu0 %v253
        %804 = vmatprep.subr.mxu0 0.0
        %805 = vmatpush1.msra.mxu0 0.0
        %806 = vmatprep.subr.mxu0 0.0
        %807 = vmatpush1.msra.mxu0 0.0
        %808 = vmatprep.subr.mxu0 0.0
        %809 = vmatpush1.msra.mxu0 0.0
        %810 = vmatprep.subr.mxu0 0.0
        %811 = vmatpush1.msra.mxu0 0.0
        %812 = vmatprep.subr.mxu0 0.0
        %813 = vmatpush1.msra.mxu0 0.0
        %814 = vmatprep.subr.mxu0 0.0
        %815 = vmatpush1.msra.mxu0 0.0
        %816 = vmatprep.subr.mxu0 0.0
        %817 = vmatpush1.msra.mxu0 0.0
        %818 = vmatprep.subr.mxu0 0.0
        %819 = vmatpush1.msra.mxu0 0.0
        %820 = vmatprep.subr.mxu0 0.0
        %821 = vmatpush1.msra.mxu0 0.0
        %822 = vmatprep.subr.mxu0 0.0
        %823 = vmatpush1.msra.mxu0 0.0
        %824 = vmatprep.subr.mxu0 0.0
        %825 = vmatpush1.msra.mxu0 0.0
        %826 = vmatprep.subr.mxu0 0.0
        %827 = vmatpush1.msra.mxu0 0.0
        %828 = vmatprep.subr.mxu0 0.0
        %829 = vmatpush1.msra.mxu0 0.0
        %830 = vmatprep.subr.mxu0 0.0
        %831 = vmatpush1.msra.mxu0 0.0
        %832 = vmatprep.subr.mxu0 0.0
        %833 = vmatpush1.msra.mxu0 0.0
        %834 = vmatprep.subr.mxu0 0.0
        %835 = vmatpush1.msra.mxu0 0.0
        %836 = vmatprep.subr.mxu0 0.0
        %837 = vmatpush1.msra.mxu0 0.0
        %838 = vmatprep.subr.mxu0 0.0
        %839 = vmatpush1.msra.mxu0 0.0
        %840 = vmatprep.subr.mxu0 0.0
        %841 = vmatpush1.msra.mxu0 0.0
        %842 = vmatprep.subr.mxu0 0.0
        %843 = vmatpush1.msra.mxu0 0.0
        %844 = vmatprep.subr.mxu0 0.0
        %845 = vmatpush1.msra.mxu0 0.0
        %846 = vmatprep.subr.mxu0 0.0
        %847 = vmatpush1.msra.mxu0 0.0
        %848 = vmatprep.subr.mxu0 0.0
        %849 = vmatpush1.msra.mxu0 0.0
        %850 = vmatprep.subr.mxu0 0.0
        %851 = vmatpush1.msra.mxu0 0.0
        %852 = vmatprep.subr.mxu0 0.0
        %853 = vmatpush1.msra.mxu0 0.0
        %854 = vmatprep.subr.mxu0 0.0
        %855 = vmatpush1.msra.mxu0 0.0
        %856 = vmatprep.subr.mxu0 0.0
        %857 = vmatpush1.msra.mxu0 0.0
        %858 = vmatprep.subr.mxu0 0.0
        %859 = vmatpush1.msra.mxu0 0.0
        %860 = vmatprep.subr.mxu0 0.0
        %861 = vmatpush1.msra.mxu0 0.0
        %862 = vmatprep.subr.mxu0 0.0
        %863 = vmatpush1.msra.mxu0 0.0
        %864 = vmatprep.subr.mxu0 0.0
        %865 = vmatpush1.msra.mxu0 0.0
        %866 = vmatprep.mubr.f32.mxu0 0.0
        %867 = vmatmul.mubr.f32.gmra.mrb[0].mxu0 %v797
        %v868 = vpop.f32.mrb[0].mxu0
        %v869 = vadd.f32 %v788, %v868
        %v870 = vpop.f32.mrb[0].mxu0
        %871 = vmatprep.mubr.f32.mxu0 0.0
        %872 = vmatmul.mubr.f32.gmra.mrb[0].mxu0 %v800
        %v873 = vpop.f32.mrb[0].mxu0
        %v874 = vadd.f32 %v793, %v873
        %v875 = vpop.f32.mrb[0].mxu0
        %876 = vdwg.mxu0
        %v879 = vcombine.high %v869, %v869
        %v880 = vcombine.high %v874, %v874
        %881 = vrot.lane.b32.xlu0 %v869, 8
        %v882 = vpop.permute.xlu0 %881
        %883 = vrot.lane.b32.xlu0 %v879, 8
        %v884 = vpop.permute.xlu0 %883
        %885 = vrot.lane.b32.xlu0 %v874, 8
        %v886 = vpop.permute.xlu0 %885
        %887 = vrot.lane.b32.xlu0 %v880, 8
        %v888 = vpop.permute.xlu0 %887
        %893 = vst.msk [vmem:[%s704] sm:$0xf] %vm525, %v882
        %894 = vst.msk [vmem:[%s704 + $0x8] sm:$0xf] %vm525, %v884
        %895 = vst.msk [vmem:[%s704 + $0x10] sm:$0xf] %vm525, %v886
        %896 = vst.msk [vmem:[%s704 + $0x18] sm:$0xf] %vm525, %v888
        %s897 = sand.u32 %s65, 1
        %s898 = scalar_lea.sflag [#allocation3], %s897
        %s899 = sand.u32 %s65, 1
        %s900 = smul.addr %s899, 32
        %s901 = scalar_lea.vmem [#allocation2], %s900
        // Predicated region
        $region25: #{tpu_custom_call.1} parent=23 // pred_check
          %p902 = pneg %p75
        $region26: #{tpu_custom_call.1} parent=23 // pred_check_branch
          %904 = sbr.rel (%p902) target = $region28
        $region27: #{tpu_custom_call.1} parent=23 // pred_region
          %s906 = ssub.s32 512, 512
          %907 = vsyncadd %s898, %s906
          %s908 = smul.addr %s20, 8
          %s909 = smul.addr %s19, 16
          %s910 = sadd.s32 %s908, %s909
          %s911 = smul.addr %s910, 64
          %s912 = scalar_lea.hbm %s1, %s911
          %s913 = sshll.u32 %s901, 4
          %s914 = int_to_ptr.vmem [resolvable:$true] %s913
          %919 = dma.vmem_to_hbm [thread:$0]  %s914, 512, %s912, %s898, 64, 64, 4
        $region28: #{tpu_custom_call.1} parent=23 // pred_fallthru
          _
      $region24: #{tpu_custom_call.1} parent=5 // pred_fallthru
        _
      %p920 = scmp.le.s32.totalorder 2, %s10
      // Predicated region
      $region29: #{tpu_custom_call.1} parent=5 // pred_check
        %p921 = pneg %p920
      $region30: #{tpu_custom_call.1} parent=5 // pred_check_branch
        %923 = sbr.rel (%p921) target = $region32
      $region31: #{tpu_custom_call.1} parent=5 // pred_region
        %s924 = ssub.s32 %s10, 2
        // Predicated region
        $region33: #{tpu_custom_call.1} parent=31 // pred_check
          %p925 = pneg %p81
        $region34: #{tpu_custom_call.1} parent=31 // pred_check_branch
          %927 = sbr.rel (%p925) target = $region36
        $region35: #{tpu_custom_call.1} parent=31 // pred_region
          %s928 = sand.u32 %s66, 1
          %s929 = scalar_lea.sflag [#allocation3], %s928
          %s930 = sand.u32 %s66, 1
          %s931 = smul.addr %s930, 32
          %s932 = scalar_lea.vmem [#allocation2], %s931
          %933 = dma.done %s929, 512
        $region36: #{tpu_custom_call.1} parent=31 // pred_fallthru
          _
      $region32: #{tpu_custom_call.1} parent=5 // pred_fallthru
        _
    $region6: #{tpu_custom_call.1} parent=1 // loop_footer
      %s14 = sadd.s32 1, %s10
    $region7: #{tpu_custom_call.1} parent=1 // loop_footer_branch
      %9 = sbr.rel target = $region3
    $region8: #{tpu_custom_call.1} parent=1 // loop_exit
      _
    %934 = vsyncpa [#allocation3], 1
    %s935 = scalar_lea.sflag [#allocation3], 1
    %936 = vsyncpa %s935, 1

</llo_original>
